<compile_context>
chip_gen: v7x
topology: tpu7x:2x2x1
jax: 0.10.0
libtpu: 0.0.40
codegen_flags: <defaults>
</compile_context>

<pallas_src>
import functools
import math

import jax
import jax.numpy as jnp
from jax import lax
from jax.experimental import pallas as pl
from jax.experimental.pallas import tpu as pltpu


# ---------------------------------------------------------------------------
# Small helpers
# ---------------------------------------------------------------------------

def _round_up(x, m):
    return ((x + m - 1) // m) * m


def _pad_to(x, shape):
    pads = [(0, s - d) for d, s in zip(x.shape, shape)]
    if all(p == (0, 0) for p in pads):
        return x
    return jnp.pad(x, pads)


def _sublane(dtype):
    # f32 -> 8, bf16 -> 16, int8/fp8 -> 32 (sub-32-bit dtypes pack sublanes).
    return max(8, 32 // jnp.dtype(dtype).itemsize)


@functools.lru_cache(maxsize=None)
def _vmem_limit_bytes():
    cap = 128 * 1024 * 1024
    try:
        info = pltpu.get_tpu_info()
        cap = int(getattr(info, "vmem_capacity_bytes", cap) or cap)
    except Exception:
        pass
    # Leave headroom below physical VMEM for double-buffered BlockSpec inputs
    # and compiler-internal scratch (matters most on v7x: 64 MiB -> 48 MiB).
    return int(min(cap * 3 // 4, 96 * 1024 * 1024))


def _pick_tile(extent, cands, align):
    """Largest candidate tile with low padding waste; the whole (aligned)
    extent when it already fits in the largest candidate."""
    ext_a = _round_up(extent, align)
    if ext_a <= cands[0]:
        return ext_a
    for t in cands:                                  # descending
        if (_round_up(extent, t) - extent) * 8 <= extent:   # <= 12.5% waste
            return t
    return cands[-1]


# ---------------------------------------------------------------------------
# Tiled matmul (+ optional bias) kernel: y = x @ W (+ b)
# ---------------------------------------------------------------------------

def _mm_kernel(x_ref, w_ref, o_ref, acc_ref):
    @pl.when(pl.program_id(2) == 0)
    def _():
        acc_ref[...] = jnp.zeros_like(acc_ref)

    # Native-dtype MXU matmul, f32 accumulation.
    acc_ref[...] += jnp.dot(x_ref[...], w_ref[...],
                            preferred_element_type=jnp.float32)

    @pl.when(pl.program_id(2) == pl.num_programs(2) - 1)
    def _():
        o_ref[...] = acc_ref[...].astype(o_ref.dtype)


def _mm_bias_kernel(x_ref, w_ref, b_ref, o_ref, acc_ref):
    @pl.when(pl.program_id(2) == 0)
    def _():
        acc_ref[...] = jnp.zeros_like(acc_ref)

    acc_ref[...] += jnp.dot(x_ref[...], w_ref[...],
                            preferred_element_type=jnp.float32)

    @pl.when(pl.program_id(2) == pl.num_programs(2) - 1)
    def _():
        # Bias added in the f32 accumulator before the final downcast.
        o_ref[...] = (acc_ref[...] + b_ref[...].astype(jnp.float32)
                      ).astype(o_ref.dtype)


def linear(x, w, b=None):
    """y = x @ w (+ b).  x: (..., K), w: (K, N), b: (N,) or None."""
    orig_shape = x.shape
    K = orig_shape[-1]
    N = w.shape[1]
    x2 = x.reshape(-1, K)
    M = x2.shape[0]

    itemsize = jnp.dtype(x.dtype).itemsize
    sub = _sublane(x.dtype)

    # Tile selection: largest candidates that keep padding waste small.
    # Max usage (tm=tn=512, tk=1024, f32, double-buffered) ~= 11.5 MiB, well
    # inside the v7x budget (~48 MiB); bf16 can afford a deeper K tile.
    mn_cands = (512, 256, 128)
    k_cands = (2048, 1024, 512, 256) if itemsize <= 2 else (1024, 512, 256)
    tm = _pick_tile(M, mn_cands, sub)
    tn = _pick_tile(N, mn_cands, 128)
    tk = _pick_tile(K, k_cands, 128)

    Mp, Np, Kp = _round_up(M, tm), _round_up(N, tn), _round_up(K, tk)
    xp = _pad_to(x2, (Mp, Kp))
    wp = _pad_to(w, (Kp, Np))

    grid = (Mp // tm, Np // tn, Kp // tk)

    x_spec = pl.BlockSpec((tm, tk), lambda i, j, k: (i, k))
    w_spec = pl.BlockSpec((tk, tn), lambda i, j, k: (k, j))
    o_spec = pl.BlockSpec((tm, tn), lambda i, j, k: (i, j))

    cost = pl.CostEstimate(
        flops=2 * Mp * Np * Kp,
        transcendentals=0,
        bytes_accessed=(Mp * Kp + Kp * Np + Mp * Np) * itemsize)

    if b is not None:
        b2 = _pad_to(b.reshape(1, N), (1, Np))
        kernel = _mm_bias_kernel
        in_specs = [x_spec, w_spec,
                    pl.BlockSpec((1, tn), lambda i, j, k: (0, j))]
        args = (xp, wp, b2)
    else:
        kernel = _mm_kernel
        in_specs = [x_spec, w_spec]
        args = (xp, wp)

    out = pl.pallas_call(
        kernel,
        out_shape=jax.ShapeDtypeStruct((Mp, Np), x.dtype),
        grid_spec=pltpu.PrefetchScalarGridSpec(
            num_scalar_prefetch=0,
            grid=grid,
            in_specs=in_specs,
            out_specs=o_spec,
            scratch_shapes=[pltpu.VMEM((tm, tn), jnp.float32)],
        ),
        compiler_params=pltpu.CompilerParams(
            dimension_semantics=("parallel", "parallel", "arbitrary"),
            vmem_limit_bytes=_vmem_limit_bytes()),
        cost_estimate=cost,
    )(*args)

    out = out[:M, :N]
    return out.reshape(orig_shape[:-1] + (N,))


# ---------------------------------------------------------------------------
# Flash-attention kernel (online softmax over kv tiles)
# ---------------------------------------------------------------------------

def _flash_attn_kernel(q_ref, k_ref, v_ref, o_ref, m_sc, l_sc, acc_sc,
                       *, scale, block_k, kv_len, kv_axis, mask_kv):
    ki = pl.program_id(kv_axis)

    @pl.when(ki == 0)
    def _():
        m_sc[...] = jnp.full(m_sc.shape, -jnp.inf, dtype=m_sc.dtype)
        l_sc[...] = jnp.zeros_like(l_sc)
        acc_sc[...] = jnp.zeros_like(acc_sc)

    q = q_ref[...]                      # (nb, tq, D), native dtype
    k = k_ref[...]                      # (nb, tk, D)
    v = v_ref[...]                      # (nb, tk, D)

    # s = (q @ k^T) * scale, f32 accumulation on the MXU (batched over nb).
    s = jnp.einsum('bqd,bkd->bqk', q, k,
                   preferred_element_type=jnp.float32) * scale

    if mask_kv:
        # Only built when Sk does not divide the kv tile (trace-time check);
        # full interior tiles of the common (aligned) case skip this entirely.
        kv_idx = ki * block_k + lax.broadcasted_iota(jnp.int32, s.shape, 2)
        s = jnp.where(kv_idx < kv_len, s, -1e30)

    m_prev = m_sc[...]                                       # (nb, tq, 1)
    m_new = jnp.maximum(m_prev, s.max(axis=-1, keepdims=True))
    alpha = jnp.exp(m_prev - m_new)
    p = jnp.exp(s - m_new)                                   # (nb, tq, tk)

    l_sc[...] = alpha * l_sc[...] + p.sum(axis=-1, keepdims=True)
    acc_sc[...] = alpha * acc_sc[...] + jnp.einsum(
        'bqk,bkd->bqd', p.astype(v.dtype), v,
        preferred_element_type=jnp.float32)
    m_sc[...] = m_new

    @pl.when(ki == pl.num_programs(kv_axis) - 1)
    def _():
        inv_l = pl.reciprocal(l_sc[...], approx=True)        # EUP slot
        o_ref[...] = (acc_sc[...] * inv_l).astype(o_ref.dtype)


def _heads_per_block(BH, tq, tk, D):
    # Fold several (b, h) pairs per grid step when per-head tiles are tiny
    # (amortizes per-step overhead).  Keep the f32 score tile and accumulator
    # modest and keep >= 2 groups so both TensorCores get work (v7x).
    for nb in (8, 4, 2):
        if BH % nb:
            continue
        if BH // nb < 2:
            continue
        if nb * tq * tk * 4 > (1 << 19) or nb * tq * D * 4 > (1 << 19):
            continue
        return nb
    return 1


def _attn_cost(BH, Sq_p, Sk_p, D, itemsize):
    return pl.CostEstimate(
        flops=4 * BH * Sq_p * Sk_p * D,
        transcendentals=BH * Sq_p * Sk_p,
        bytes_accessed=(BH * (Sq_p + 2 * Sk_p + Sq_p) * D) * itemsize)


def _attention_heads_layout(q, k, v, scale, *, block_q=512, block_k=256):
    """q: (B, H, Sq, D), k/v: (B, H, Sk, D) -> (B, H, Sq, D)."""
    B, H, Sq, D = q.shape
    Sk = k.shape[2]
    BH = B * H

    q3 = q.reshape(BH, Sq, D)
    k3 = k.reshape(BH, Sk, D)
    v3 = v.reshape(BH, Sk, D)

    sub = _sublane(q.dtype)
    tq = min(block_q, _round_up(Sq, sub))
    tk = min(block_k, _round_up(Sk, sub))
    Sq_p = _round_up(Sq, tq)
    Sk_p = _round_up(Sk, tk)

    q3 = _pad_to(q3, (BH, Sq_p, D))
    k3 = _pad_to(k3, (BH, Sk_p, D))
    v3 = _pad_to(v3, (BH, Sk_p, D))

    nb = _heads_per_block(BH, tq, tk, D)
    grid = (BH // nb, Sq_p // tq, Sk_p // tk)
    mask_kv = (Sk % tk) != 0

    kernel = functools.partial(_flash_attn_kernel, scale=scale, block_k=tk,
                               kv_len=Sk, kv_axis=2, mask_kv=mask_kv)
    itemsize = jnp.dtype(q.dtype).itemsize

    out = pl.pallas_call(
        kernel,
        out_shape=jax.ShapeDtypeStruct((BH, Sq_p, D), q.dtype),
        grid_spec=pltpu.PrefetchScalarGridSpec(
            num_scalar_prefetch=0,
            grid=grid,
            in_specs=[
                pl.BlockSpec((nb, tq, D), lambda g, qi, ki: (g, qi, 0)),
                pl.BlockSpec((nb, tk, D), lambda g, qi, ki: (g, ki, 0)),
                pl.BlockSpec((nb, tk, D), lambda g, qi, ki: (g, ki, 0)),
            ],
            out_specs=pl.BlockSpec((nb, tq, D), lambda g, qi, ki: (g, qi, 0)),
            scratch_shapes=[
                pltpu.VMEM((nb, tq, 1), jnp.float32),   # running max
                pltpu.VMEM((nb, tq, 1), jnp.float32),   # running sum
                pltpu.VMEM((nb, tq, D), jnp.float32),   # output accumulator
            ],
        ),
        compiler_params=pltpu.CompilerParams(
            dimension_semantics=("parallel", "parallel", "arbitrary"),
            vmem_limit_bytes=_vmem_limit_bytes()),
        cost_estimate=_attn_cost(BH, Sq_p, Sk_p, D, itemsize),
    )(q3, k3, v3)

    return out[:, :Sq, :].reshape(B, H, Sq, D)


def _attention_fused_layout(q, k, v, scale, n_head, head_dim,
                            *, block_q=512, block_k=256):
    """Lane-aligned heads (head_dim % 128 == 0): q/k/v stay in (B, S, H*D)
    layout; the head is selected by the BlockSpec index_map, so there are no
    split/merge transposes and the output store is 128-lane dense."""
    B, Sq, HD = q.shape
    Sk = k.shape[1]
    D = head_dim

    sub = _sublane(q.dtype)
    tq = min(block_q, _round_up(Sq, sub))
    tk = min(block_k, _round_up(Sk, sub))
    Sq_p = _round_up(Sq, tq)
    Sk_p = _round_up(Sk, tk)

    qp = _pad_to(q, (B, Sq_p, HD))
    kp = _pad_to(k, (B, Sk_p, HD))
    vp = _pad_to(v, (B, Sk_p, HD))

    grid = (B, n_head, Sq_p // tq, Sk_p // tk)
    mask_kv = (Sk % tk) != 0

    kernel = functools.partial(_flash_attn_kernel, scale=scale, block_k=tk,
                               kv_len=Sk, kv_axis=3, mask_kv=mask_kv)
    itemsize = jnp.dtype(q.dtype).itemsize

    out = pl.pallas_call(
        kernel,
        out_shape=jax.ShapeDtypeStruct((B, Sq_p, HD), q.dtype),
        grid_spec=pltpu.PrefetchScalarGridSpec(
            num_scalar_prefetch=0,
            grid=grid,
            in_specs=[
                pl.BlockSpec((1, tq, D), lambda b, h, qi, ki: (b, qi, h)),
                pl.BlockSpec((1, tk, D), lambda b, h, qi, ki: (b, ki, h)),
                pl.BlockSpec((1, tk, D), lambda b, h, qi, ki: (b, ki, h)),
            ],
            out_specs=pl.BlockSpec((1, tq, D), lambda b, h, qi, ki: (b, qi, h)),
            scratch_shapes=[
                pltpu.VMEM((1, tq, 1), jnp.float32),
                pltpu.VMEM((1, tq, 1), jnp.float32),
                pltpu.VMEM((1, tq, D), jnp.float32),
            ],
        ),
        compiler_params=pltpu.CompilerParams(
            dimension_semantics=("parallel", "parallel", "parallel",
                                 "arbitrary"),
            vmem_limit_bytes=_vmem_limit_bytes()),
        cost_estimate=_attn_cost(B * n_head, Sq_p, Sk_p, D, itemsize),
    )(qp, kp, vp)

    return out[:, :Sq, :]


# ---------------------------------------------------------------------------
# Attention module forward
# ---------------------------------------------------------------------------

def attention_forward(fr, to, wq, wkv, wo, bo, *, n_head):
    """PyTorch Attention.forward(fr, to).  fr: (B, Sq, dim), to: (B, Sk, dim)."""
    self_attn = to is None
    if self_attn:
        to = fr
    B, Sq, dim = fr.shape
    Sk = to.shape[1]
    inner_dim = wq.shape[1]
    head_dim = inner_dim // n_head
    scale = head_dim ** (-0.5)

    if self_attn:
        # Fused q/kv projection: one pallas_call, `fr` read from HBM once.
        wqkv = jnp.concatenate([wq, wkv], axis=1)     # (dim, 3*inner_dim)
        qkv = linear(fr, wqkv)                        # (B, Sq, 3*inner_dim)
        q = qkv[..., :inner_dim]
        k = qkv[..., inner_dim:2 * inner_dim]
        v = qkv[..., 2 * inner_dim:]
    else:
        q = linear(fr, wq)                            # (B, Sq, inner_dim)
        kv = linear(to, wkv)                          # (B, Sk, 2*inner_dim)
        k = kv[..., :inner_dim]
        v = kv[..., inner_dim:]

    if head_dim % 128 == 0:
        out = _attention_fused_layout(q, k, v, scale, n_head, head_dim)
    else:
        # TODO(synk): for head_dim < 128 a head-packed layout (multiple heads
        # per 128-lane output block) would give unmasked lane-dense stores;
        # we fall back to the (B, H, S, D) layout with XLA transposes, folding
        # several heads per grid step inside the kernel instead.
        def split_heads(t, S):
            return t.reshape(B, S, n_head, head_dim).transpose(0, 2, 1, 3)

        out = _attention_heads_layout(split_heads(q, Sq), split_heads(k, Sk),
                                      split_heads(v, Sk), scale)
        out = out.transpose(0, 2, 1, 3).reshape(B, Sq, inner_dim)

    # to_out: Linear(inner_dim, dim) + Dropout(p=0) == identity (omitted).
    return linear(out, wo, bo)


def init_params(key, dim, n_head, head_dim, dtype=jnp.float32):
    """nn.Linear-style kaiming-uniform init; weights stored as (in, out)."""
    inner_dim = n_head * head_dim
    kq, kkv, kwo, kbo = jax.random.split(key, 4)
    b_in = 1.0 / math.sqrt(dim)            # fan_in = dim for to_q / to_kv
    b_inner = 1.0 / math.sqrt(inner_dim)   # fan_in = inner_dim for to_out
    wq = jax.random.uniform(kq, (dim, inner_dim), dtype, -b_in, b_in)
    wkv = jax.random.uniform(kkv, (dim, 2 * inner_dim), dtype, -b_in, b_in)
    wo = jax.random.uniform(kwo, (inner_dim, dim), dtype, -b_inner, b_inner)
    bo = jax.random.uniform(kbo, (dim,), dtype, -b_inner, b_inner)
    return wq, wkv, wo, bo


def reference_attention(fr, to, wq, wkv, wo, bo, n_head):
    """Pure-JAX reference mirroring the PyTorch module."""
    if to is None:
        to = fr
    B, Sq, _ = fr.shape
    inner = wq.shape[1]
    hd = inner // n_head
    q = fr @ wq
    kv = to @ wkv
    k, v = kv[..., :inner], kv[..., inner:]

    def sh(t):
        S = t.shape[1]
        return t.reshape(B, S, n_head, hd).transpose(0, 2, 1, 3)

    qh, kh, vh = sh(q), sh(k), sh(v)
    dots = jnp.einsum("bhqd,bhkd->bhqk", qh, kh) * (hd ** -0.5)
    attn = jax.nn.softmax(dots, axis=-1)
    out = jnp.einsum("bhqk,bhkd->bhqd", attn, vh)
    out = out.transpose(0, 2, 1, 3).reshape(B, Sq, inner)
    return out @ wo + bo


if __name__ == "__main__":
    key = jax.random.PRNGKey(0)

    # --- Test 1: self-attention, head_dim < 128 (head-split layout path) ----
    batch, seq, dim, n_head, head_dim = 2, 8, 32, 4, 8
    k1, k2 = jax.random.split(key)
    fr = jax.random.normal(k1, (batch, seq, dim), dtype=jnp.float32)
    wq, wkv, wo, bo = init_params(k2, dim, n_head, head_dim)

    y = attention_forward(fr, None, wq, wkv, wo, bo, n_head=n_head)
    y = jax.block_until_ready(y)
    y_ref = reference_attention(fr, None, wq, wkv, wo, bo, n_head)
    assert y.shape == (batch, seq, dim)
    err = float(jnp.max(jnp.abs(y - y_ref)))
    assert jnp.allclose(y, y_ref, atol=2e-3, rtol=2e-3), \
        f"self-attn max abs err {err}"

    # --- Test 2: cross-attention, head_dim = 128 (fused lane-aligned layout;
    #     Sk=10 also exercises the kv-padding mask path) ---------------------
    dim2, n_head2, head_dim2, sq2, sk2 = 64, 2, 128, 8, 10
    k3, k4, k5 = jax.random.split(k2, 3)
    fr2 = jax.random.normal(k3, (batch, sq2, dim2), dtype=jnp.float32)
    to2 = jax.random.normal(k4, (batch, sk2, dim2), dtype=jnp.float32)
    wq2, wkv2, wo2, bo2 = init_params(k5, dim2, n_head2, head_dim2)

    y2 = attention_forward(fr2, to2, wq2, wkv2, wo2, bo2, n_head=n_head2)
    y2 = jax.block_until_ready(y2)
    y2_ref = reference_attention(fr2, to2, wq2, wkv2, wo2, bo2, n_head2)
    assert y2.shape == (batch, sq2, dim2)
    err2 = float(jnp.max(jnp.abs(y2 - y2_ref)))
    assert jnp.allclose(y2, y2_ref, atol=2e-3, rtol=2e-3), \
        f"cross-attn max abs err {err2}"

    print("KERNEL_OK")
</pallas_src>

<mosaic_0001>
module attributes {stable_mosaic.version = 11 : i64} {
  func.func @_mm_kernel(%arg0: i32, %arg1: i32, %arg2: i32, %arg3: memref<16x128xf32, #tpu.memory_space<vmem>>, %arg4: memref<128x128xf32, #tpu.memory_space<vmem>>, %arg5: memref<16x128xf32, #tpu.memory_space<vmem>>, %arg6: memref<16x128xf32, #tpu.memory_space<vmem>>) attributes {dimension_semantics = [#tpu.dimension_semantics<parallel>, #tpu.dimension_semantics<parallel>, #tpu.dimension_semantics<arbitrary>], iteration_bounds = array<i64: 1, 1, 1>, scalar_prefetch = 0 : i64, scratch_operands = 1 : i64, tpu.core_type = #tpu.core_type<tc>, window_params = [{transform_indices = @transform_0, window_bounds = array<i64: 16, 128>}, {transform_indices = @transform_1, window_bounds = array<i64: 128, 128>}, {transform_indices = @transform_2, window_bounds = array<i64: 16, 128>}]} {
    %c0_i32 = arith.constant 0 : i32
    %0 = arith.cmpi eq, %arg2, %c0_i32 : i32
    %1 = arith.extui %0 : i1 to i32
    %c0_i32_0 = arith.constant 0 : i32
    %2 = arith.cmpi ne, %1, %c0_i32_0 : i32
    scf.if %2 {
      %cst_10 = arith.constant 0.000000e+00 : f32
      %12 = vector.broadcast %cst_10 : f32 to vector<16x128xf32>
      %c0_11 = arith.constant 0 : index
      %c0_12 = arith.constant 0 : index
      %13 = vector.load %arg6[%c0_11, %c0_12] : memref<16x128xf32, #tpu.memory_space<vmem>>, vector<16x128xf32>
      tpu.vector_store %arg6[%c0_11, %c0_12], %12 {strides = array<i32>} : memref<16x128xf32, #tpu.memory_space<vmem>>, vector<16x128xf32>,
    } else {
    }
    %c0 = arith.constant 0 : index
    %c0_1 = arith.constant 0 : index
    %3 = vector.load %arg6[%c0, %c0_1] : memref<16x128xf32, #tpu.memory_space<vmem>>, vector<16x128xf32>
    %c0_2 = arith.constant 0 : index
    %c0_3 = arith.constant 0 : index
    %4 = vector.load %arg3[%c0_2, %c0_3] : memref<16x128xf32, #tpu.memory_space<vmem>>, vector<16x128xf32>
    %c0_4 = arith.constant 0 : index
    %c0_5 = arith.constant 0 : index
    %5 = vector.load %arg4[%c0_4, %c0_5] : memref<128x128xf32, #tpu.memory_space<vmem>>, vector<128x128xf32>
    %cst = arith.constant dense<0.000000e+00> : vector<16x128xf32>
    %6 = tpu.matmul %4, %5, %cst {dimension_numbers = #tpu.dot_dimension_numbers<[1], [0], [0], [1], [0, 0, 1, 1], [], []>} : vector<16x128xf32>, vector<128x128xf32>, vector<16x128xf32> -> vector<16x128xf32>
    %7 = arith.addf %3, %6 : vector<16x128xf32>
    %c0_6 = arith.constant 0 : index
    %c0_7 = arith.constant 0 : index
    %8 = vector.load %arg6[%c0_6, %c0_7] : memref<16x128xf32, #tpu.memory_space<vmem>>, vector<16x128xf32>
    tpu.vector_store %arg6[%c0_6, %c0_7], %7 {strides = array<i32>} : memref<16x128xf32, #tpu.memory_space<vmem>>, vector<16x128xf32>,
    %c0_i32_8 = arith.constant 0 : i32
    %9 = arith.cmpi eq, %arg2, %c0_i32_8 : i32
    %10 = arith.extui %9 : i1 to i32
    %c0_i32_9 = arith.constant 0 : i32
    %11 = arith.cmpi ne, %10, %c0_i32_9 : i32
    scf.if %11 {
      %c0_10 = arith.constant 0 : index
      %c0_11 = arith.constant 0 : index
      %12 = vector.load %arg6[%c0_10, %c0_11] : memref<16x128xf32, #tpu.memory_space<vmem>>, vector<16x128xf32>
      %c0_12 = arith.constant 0 : index
      %c0_13 = arith.constant 0 : index
      %13 = vector.load %arg5[%c0_12, %c0_13] : memref<16x128xf32, #tpu.memory_space<vmem>>, vector<16x128xf32>
      tpu.vector_store %arg5[%c0_12, %c0_13], %12 {strides = array<i32>} : memref<16x128xf32, #tpu.memory_space<vmem>>, vector<16x128xf32>,
    } else {
    }
    return
  }
  func.func @transform_0(%arg0: i32, %arg1: i32, %arg2: i32) -> (i32, i32) {
    %c0_i32 = arith.constant 0 : i32
    return %arg0, %arg2 : i32, i32
  }
  func.func @transform_1(%arg0: i32, %arg1: i32, %arg2: i32) -> (i32, i32) {
    %c0_i32 = arith.constant 0 : i32
    return %arg2, %arg1 : i32, i32
  }
  func.func @transform_2(%arg0: i32, %arg1: i32, %arg2: i32) -> (i32, i32) {
    %c0_i32 = arith.constant 0 : i32
    return %arg0, %arg1 : i32, i32
  }
}

</mosaic_0001>

<llo_original>
// kernel: tpu_custom_call.1
$region0: #{tpu_custom_call.1}
  #allocation0 [shape = 'u32[]', space=smem, size = 0x4, offset = 0x4, fixed_abs, tag = 'smem constant byte address 0x4 - core index']
  #allocation1 [shape = 'u32[144,128]{1,0:T(1,128)}', space=vmem, size = 0x12000, scoped, tag = 'internal scratch']
  #allocation2 [shape = 'f32[16,128]{1,0:T(8,128)}', space=vmem, size = 0x2000, scoped, tag = 'scratch operand']
  %s0 = inlined_call_operand.hbm [shape: f32[16,128], index: 0, kind: input, shape index: {}]
  %s1 = inlined_call_operand.hbm [shape: f32[128,128], index: 1, kind: input, shape index: {}]
  %s2 = inlined_call_operand.hbm [shape: f32[16,128], index: 2, kind: output, shape index: {}]
  %s3 = sld [smem:[#allocation0]]
  $region34: #{tpu_custom_call.1} parent=0
    _
  %s5 = ssub.s32 1, %s3
  %s6 = scalar_select 0, %s5, %s3
  $region1: #{tpu_custom_call.1} parent=0
    #allocation3 [shape = 'u8[8192]{0}', space=vmem, size = 0x2000, scoped, tag = 'input window, operand 0, single buffered']
    #allocation4 [shape = 's32[1]{0}', space=sflag, size = 0x4, scoped, tag = 'scoped memory for tpu_custom_call.1']
    #allocation5 [shape = 's32[1]{0}', space=sflag, size = 0x4, scoped, tag = 'scoped memory for tpu_custom_call.1']
    #allocation6 [shape = 'u8[65536]{0}', space=vmem, size = 0x10000, scoped, tag = 'input window, operand 1, single buffered']
    #allocation7 [shape = 's32[1]{0}', space=sflag, size = 0x4, scoped, tag = 'scoped memory for tpu_custom_call.1']
    #allocation8 [shape = 'u8[8192]{0}', space=vmem, size = 0x2000, scoped, tag = 'output window, operand 0, single buffered']
    %7 = vsyncpa [#allocation4], 0
    %8 = vsyncpa [#allocation7], 0
    %9 = vsyncpa [#allocation5], 0
    // Predicated region
    $region2: #{tpu_custom_call.1} parent=1 // pred_check
      _
    $region3: #{tpu_custom_call.1} parent=1 // pred_check_branch
      %11 = sbr.rel (0) target = $region5
    $region4: #{tpu_custom_call.1} parent=1 // pred_region
      %s13 = ssub.s32 256, 256
      %14 = vsyncadd [#allocation4], %s13
      %s15 = sshll.u32 [#allocation3], 4
      %s16 = int_to_ptr.vmem [resolvable:$true] %s15
      %21 = dma.hbm_to_vmem [thread:$0]  %s0, 256, %s16, [#allocation4], 128, 128, 8
    $region5: #{tpu_custom_call.1} parent=1 // pred_fallthru
      _
    // Predicated region
    $region6: #{tpu_custom_call.1} parent=1 // pred_check
      _
    $region7: #{tpu_custom_call.1} parent=1 // pred_check_branch
      %23 = sbr.rel (0) target = $region9
    $region8: #{tpu_custom_call.1} parent=1 // pred_region
      %s25 = ssub.s32 2048, 2048
      %26 = vsyncadd [#allocation7], %s25
      %s27 = sshll.u32 [#allocation6], 4
      %s28 = int_to_ptr.vmem [resolvable:$true] %s27
      %33 = dma.hbm_to_vmem [thread:$0]  %s1, 2048, %s28, [#allocation7], 128, 128, 8
    $region9: #{tpu_custom_call.1} parent=1 // pred_fallthru
      _
    // Predicated region
    $region10: #{tpu_custom_call.1} parent=1 // pred_check
      _
    $region11: #{tpu_custom_call.1} parent=1 // pred_check_branch
      %35 = sbr.rel (0) target = $region13
    $region12: #{tpu_custom_call.1} parent=1 // pred_region
      %36 = dma.done [#allocation4], 256
    $region13: #{tpu_custom_call.1} parent=1 // pred_fallthru
      _
    // Predicated region
    $region14: #{tpu_custom_call.1} parent=1 // pred_check
      _
    $region15: #{tpu_custom_call.1} parent=1 // pred_check_branch
      %38 = sbr.rel (0) target = $region17
    $region16: #{tpu_custom_call.1} parent=1 // pred_region
      %39 = dma.done [#allocation7], 2048
    $region17: #{tpu_custom_call.1} parent=1 // pred_fallthru
      _
    %p40 = scmp.eq.s32.totalorder 0, 0
    // Predicated region
    $region18: #{tpu_custom_call.1} parent=1 // pred_check
      %p41 = pneg %p40
    $region19: #{tpu_custom_call.1} parent=1 // pred_check_branch
      %43 = sbr.rel (%p41) target = $region21
    $region20: #{tpu_custom_call.1} parent=1 // pred_region
      %44 = vst [vmem:[#allocation2] sm:$0xff] 0.0
      %45 = vst [vmem:[#allocation2 + $0x8] sm:$0xff] 0.0
    $region21: #{tpu_custom_call.1} parent=1 // pred_fallthru
      _
    %v46 = vld [vmem:[#allocation2] sm:$0xff]
    %v47 = vld [vmem:[#allocation2 + $0x8] sm:$0xff]
    %v48 = vld [vmem:[#allocation3] sm:$0xff]
    %v49 = vld [vmem:[#allocation3 + $0x8] sm:$0xff]
    %v50 = vld [vmem:[#allocation6] sm:$0xff]
    %v51 = vld [vmem:[#allocation6 + $0x8] sm:$0xff]
    %v52 = vld [vmem:[#allocation6 + $0x10] sm:$0xff]
    %v53 = vld [vmem:[#allocation6 + $0x18] sm:$0xff]
    %v54 = vld [vmem:[#allocation6 + $0x20] sm:$0xff]
    %v55 = vld [vmem:[#allocation6 + $0x28] sm:$0xff]
    %v56 = vld [vmem:[#allocation6 + $0x30] sm:$0xff]
    %v57 = vld [vmem:[#allocation6 + $0x38] sm:$0xff]
    %v58 = vld [vmem:[#allocation6 + $0x40] sm:$0xff]
    %v59 = vld [vmem:[#allocation6 + $0x48] sm:$0xff]
    %v60 = vld [vmem:[#allocation6 + $0x50] sm:$0xff]
    %v61 = vld [vmem:[#allocation6 + $0x58] sm:$0xff]
    %v62 = vld [vmem:[#allocation6 + $0x60] sm:$0xff]
    %v63 = vld [vmem:[#allocation6 + $0x68] sm:$0xff]
    %v64 = vld [vmem:[#allocation6 + $0x70] sm:$0xff]
    %v65 = vld [vmem:[#allocation6 + $0x78] sm:$0xff]
    %66 = vmatprep.subr.mxu0 0.0
    %67 = vmatpush1.msra.mxu0 %v50
    %68 = vmatprep.subr.mxu0 0.0
    %69 = vmatpush1.msra.mxu0 %v51
    %70 = vmatprep.subr.mxu0 0.0
    %71 = vmatpush1.msra.mxu0 %v52
    %72 = vmatprep.subr.mxu0 0.0
    %73 = vmatpush1.msra.mxu0 %v53
    %74 = vmatprep.subr.mxu0 0.0
    %75 = vmatpush1.msra.mxu0 %v54
    %76 = vmatprep.subr.mxu0 0.0
    %77 = vmatpush1.msra.mxu0 %v55
    %78 = vmatprep.subr.mxu0 0.0
    %79 = vmatpush1.msra.mxu0 %v56
    %80 = vmatprep.subr.mxu0 0.0
    %81 = vmatpush1.msra.mxu0 %v57
    %82 = vmatprep.subr.mxu0 0.0
    %83 = vmatpush1.msra.mxu0 %v58
    %84 = vmatprep.subr.mxu0 0.0
    %85 = vmatpush1.msra.mxu0 %v59
    %86 = vmatprep.subr.mxu0 0.0
    %87 = vmatpush1.msra.mxu0 %v60
    %88 = vmatprep.subr.mxu0 0.0
    %89 = vmatpush1.msra.mxu0 %v61
    %90 = vmatprep.subr.mxu0 0.0
    %91 = vmatpush1.msra.mxu0 %v62
    %92 = vmatprep.subr.mxu0 0.0
    %93 = vmatpush1.msra.mxu0 %v63
    %94 = vmatprep.subr.mxu0 0.0
    %95 = vmatpush1.msra.mxu0 %v64
    %96 = vmatprep.subr.mxu0 0.0
    %97 = vmatpush1.msra.mxu0 %v65
    %98 = vmatprep.subr.mxu0 0.0
    %99 = vmatpush1.msra.mxu0 0.0
    %100 = vmatprep.subr.mxu0 0.0
    %101 = vmatpush1.msra.mxu0 0.0
    %102 = vmatprep.subr.mxu0 0.0
    %103 = vmatpush1.msra.mxu0 0.0
    %104 = vmatprep.subr.mxu0 0.0
    %105 = vmatpush1.msra.mxu0 0.0
    %106 = vmatprep.subr.mxu0 0.0
    %107 = vmatpush1.msra.mxu0 0.0
    %108 = vmatprep.subr.mxu0 0.0
    %109 = vmatpush1.msra.mxu0 0.0
    %110 = vmatprep.subr.mxu0 0.0
    %111 = vmatpush1.msra.mxu0 0.0
    %112 = vmatprep.subr.mxu0 0.0
    %113 = vmatpush1.msra.mxu0 0.0
    %114 = vmatprep.subr.mxu0 0.0
    %115 = vmatpush1.msra.mxu0 0.0
    %116 = vmatprep.subr.mxu0 0.0
    %117 = vmatpush1.msra.mxu0 0.0
    %118 = vmatprep.subr.mxu0 0.0
    %119 = vmatpush1.msra.mxu0 0.0
    %120 = vmatprep.subr.mxu0 0.0
    %121 = vmatpush1.msra.mxu0 0.0
    %122 = vmatprep.subr.mxu0 0.0
    %123 = vmatpush1.msra.mxu0 0.0
    %124 = vmatprep.subr.mxu0 0.0
    %125 = vmatpush1.msra.mxu0 0.0
    %126 = vmatprep.subr.mxu0 0.0
    %127 = vmatpush1.msra.mxu0 0.0
    %128 = vmatprep.subr.mxu0 0.0
    %129 = vmatpush1.msra.mxu0 0.0
    %130 = vmatprep.mubr.f32.mxu0 0.0
    %131 = vmatmul.mubr.f32.gmra.mrb[0].mxu0 %v48
    %v132 = vpop.f32.mrb[0].mxu0
    %v133 = vadd.f32 0.0, %v132
    %v134 = vpop.f32.mrb[0].mxu0
    %135 = vmatprep.mubr.f32.mxu0 0.0
    %136 = vmatmul.mubr.f32.gmra.mrb[0].mxu0 %v49
    %v137 = vpop.f32.mrb[0].mxu0
    %v138 = vadd.f32 0.0, %v137
    %v139 = vpop.f32.mrb[0].mxu0
    %140 = vdwg.mxu0
    %v141 = vadd.f32 %v46, %v133
    %v142 = vadd.f32 %v47, %v138
    %143 = vst [vmem:[#allocation2] sm:$0xff] %v141
    %144 = vst [vmem:[#allocation2 + $0x8] sm:$0xff] %v142
    // Predicated region
    $region22: #{tpu_custom_call.1} parent=1 // pred_check
      %p145 = pneg %p40
    $region23: #{tpu_custom_call.1} parent=1 // pred_check_branch
      %147 = sbr.rel (%p145) target = $region25
    $region24: #{tpu_custom_call.1} parent=1 // pred_region
      %v148 = vld [vmem:[#allocation2] sm:$0xff]
      %v149 = vld [vmem:[#allocation2 + $0x8] sm:$0xff]
      %150 = vst [vmem:[#allocation8] sm:$0xff] %v148
      %151 = vst [vmem:[#allocation8 + $0x8] sm:$0xff] %v149
    $region25: #{tpu_custom_call.1} parent=1 // pred_fallthru
      _
    // Predicated region
    $region26: #{tpu_custom_call.1} parent=1 // pred_check
      _
    $region27: #{tpu_custom_call.1} parent=1 // pred_check_branch
      %153 = sbr.rel (0) target = $region29
    $region28: #{tpu_custom_call.1} parent=1 // pred_region
      %s155 = ssub.s32 256, 256
      %156 = vsyncadd [#allocation5], %s155
      %s157 = sshll.u32 [#allocation8], 4
      %s158 = int_to_ptr.vmem [resolvable:$true] %s157
      %163 = dma.vmem_to_hbm [thread:$0]  %s158, 256, %s2, [#allocation5], 128, 128, 8
    $region29: #{tpu_custom_call.1} parent=1 // pred_fallthru
      _
    // Predicated region
    $region30: #{tpu_custom_call.1} parent=1 // pred_check
      _
    $region31: #{tpu_custom_call.1} parent=1 // pred_check_branch
      %165 = sbr.rel (0) target = $region33
    $region32: #{tpu_custom_call.1} parent=1 // pred_region
      %166 = dma.done [#allocation5], 256
    $region33: #{tpu_custom_call.1} parent=1 // pred_fallthru
      _
    %167 = vsyncpa [#allocation4], 1
    %168 = vsyncpa [#allocation7], 1
    %169 = vsyncpa [#allocation5], 1

</llo_original>
